<compile_context>
chip_gen: v7x
topology: tpu7x:2x2x1
jax: 0.10.0
libtpu: 0.0.40
codegen_flags: <defaults>
</compile_context>

<pallas_src>
import functools

import jax
import jax.numpy as jnp
from jax.experimental import pallas as pl
from jax.experimental.pallas import tpu as pltpu

BN_EPS = 1e-5
LANE = 128


def _round_up(n, m):
    return ((n + m - 1) // m) * m


def _pad2d(a, rows, cols):
    r, c = a.shape
    return jnp.pad(a, ((0, rows - r), (0, cols - c)))


def _dot_bf16(x, w):
    # bf16 operands, f32 accumulation: full-rate MXU on v5e/v6e/v7x.
    return jnp.dot(x.astype(jnp.bfloat16), w.astype(jnp.bfloat16),
                   preferred_element_type=jnp.float32)


def _batchnorm_train(h, gamma, beta):
    # Fused form: one centered pass, precombined scale. Biased var (PyTorch).
    mean = jnp.mean(h, axis=0, keepdims=True)
    c = h - mean
    var = jnp.mean(c * c, axis=0, keepdims=True)
    scale = gamma * jax.lax.rsqrt(var + BN_EPS)
    return c * scale + beta


def _softplus(x):
    # numerically-stable log(1 + exp(x))
    return jnp.maximum(x, 0.0) + jnp.log(1.0 + jnp.exp(-jnp.abs(x)))


def _sigmoid(x):
    # Exact sigmoid for the user-visible output (stays strictly in [0, 1]).
    return 1.0 / (1.0 + jnp.exp(-x))


def vaex_kernel(
    x_ref, eps_ref,
    w1_ref, w2_ref, wh_ref, wd1_ref, wd2_ref, wd3_ref,
    vec_ref,                 # stacked (8, enc_p): b1,g1,bt1,b2,g2,bt2,bd1,bd2
    bh_ref, bd3_ref,
    recon_ref, musig_ref,
    *, lt_pad,
):
    x = x_ref[...]                                   # bf16 (B, d_in_p)

    b1 = vec_ref[0:1, :]
    g1 = vec_ref[1:2, :]
    bt1 = vec_ref[2:3, :]
    b2 = vec_ref[3:4, :]
    g2 = vec_ref[4:5, :]
    bt2 = vec_ref[5:6, :]
    bd1 = vec_ref[6:7, :]
    bd2 = vec_ref[7:8, :]

    # ---- encoder ----
    u1 = jnp.dot(x, w1_ref[...], preferred_element_type=jnp.float32) + b1
    u1 = jnp.maximum(_batchnorm_train(u1, g1, bt1), 0.0)
    # Dropout -> identity (inference semantics).
    # TODO(synk): training-mode dropout masks are not reproduced.

    u2 = _dot_bf16(u1, w2_ref[...]) + b2
    u2 = jnp.maximum(_batchnorm_train(u2, g2, bt2), 0.0)

    # ---- fused latent heads: one lane-dense (B, 2*lt_pad) matmul ----
    h = _dot_bf16(u2, wh_ref[...]) + bh_ref[...]
    mu = jnp.maximum(h[:, :lt_pad], 0.0)             # relu(lt_mean)
    sig = _softplus(h[:, lt_pad:])                   # softplus(lt_log_var)

    # Direct lane-aligned stores (lt_pad is a multiple of 128) — no concat copy.
    musig_ref[:, :lt_pad] = mu
    musig_ref[:, lt_pad:] = sig

    # ---- reparameterization ----
    z = mu + sig * eps_ref[...]

    # ---- decoder (all three layers fused; wd3 fits VMEM at these sizes) ----
    y1 = jnp.maximum(_dot_bf16(z, wd1_ref[...]) + bd1, 0.0)
    y2 = jnp.maximum(_dot_bf16(y1, wd2_ref[...]) + bd2, 0.0)
    y3 = _dot_bf16(y2, wd3_ref[...]) + bd3_ref[...]
    recon_ref[...] = _sigmoid(y3)


def vaex_forward(x, eps, params, img_dim):
    """x: (B, 3*img_dim*img_dim) f32, eps: (B, lt_dim) f32."""
    B, d_in = x.shape
    lt_dim = eps.shape[1]
    enc_lt = params["w1"].shape[1]

    d_in_p = _round_up(d_in, LANE)
    enc_p = _round_up(enc_lt, LANE)
    lt_p = _round_up(lt_dim, LANE)

    bf16 = jnp.bfloat16
    xp = _pad2d(x, B, d_in_p).astype(bf16)           # bf16 input DMA
    epsp = _pad2d(eps, B, lt_p)

    w1 = _pad2d(params["w1"], d_in_p, enc_p).astype(bf16)
    w2 = _pad2d(params["w2"], enc_p, enc_p).astype(bf16)
    # Fused latent heads: one (enc_p, 2*lt_p) matmul instead of two N=8 ones.
    wh = jnp.concatenate(
        [_pad2d(params["wm"], enc_p, lt_p), _pad2d(params["wv"], enc_p, lt_p)],
        axis=1).astype(bf16)
    wd1 = _pad2d(params["wd1"], lt_p, enc_p).astype(bf16)
    wd2 = _pad2d(params["wd2"], enc_p, enc_p).astype(bf16)
    wd3 = _pad2d(params["wd3"], enc_p, d_in_p).astype(bf16)

    # Collapse the eight (1, enc_p) vectors into a single (8, enc_p) DMA.
    vecs = jnp.concatenate([
        _pad2d(params["b1"], 1, enc_p), _pad2d(params["g1"], 1, enc_p),
        _pad2d(params["bt1"], 1, enc_p), _pad2d(params["b2"], 1, enc_p),
        _pad2d(params["g2"], 1, enc_p), _pad2d(params["bt2"], 1, enc_p),
        _pad2d(params["bd1"], 1, enc_p), _pad2d(params["bd2"], 1, enc_p),
    ], axis=0)
    bh = jnp.concatenate(
        [_pad2d(params["bm"], 1, lt_p), _pad2d(params["bv"], 1, lt_p)], axis=1)
    bd3 = _pad2d(params["bd3"], 1, d_in_p)

    vmem = pl.BlockSpec(memory_space=pltpu.MemorySpace.VMEM)

    # Single fused kernel: encoder + heads + reparam + full decoder.
    # Batch stays whole (BatchNorm needs the full batch resident).
    recon, musig = pl.pallas_call(
        functools.partial(vaex_kernel, lt_pad=lt_p),
        out_shape=(
            jax.ShapeDtypeStruct((B, d_in_p), jnp.float32),
            jax.ShapeDtypeStruct((B, 2 * lt_p), jnp.float32),
        ),
        in_specs=[vmem] * 11,
        out_specs=(vmem, vmem),
    )(xp, epsp, w1, w2, wh, wd1, wd2, wd3, vecs, bh, bd3)

    # Padded sig columns hold softplus(0)=ln2; they are sliced off here and
    # must never be consumed at full padded width.
    mu = musig[:, :lt_dim]
    sig = musig[:, lt_p:lt_p + lt_dim]
    x_recon = recon[:, :d_in].reshape(B, 3, img_dim, img_dim)  # NCHW
    return x_recon, mu, sig


def init_params(key, d_in, enc_lt, lt_dim):
    """Deterministic synthetic parameters (PyTorch Linear shapes, transposed)."""
    ks = jax.random.split(key, 16)

    def lin(kw, kb, fan_in, fan_out):
        bound = 1.0 / jnp.sqrt(fan_in)
        w = jax.random.uniform(kw, (fan_in, fan_out), jnp.float32, -bound, bound)
        b = jax.random.uniform(kb, (1, fan_out), jnp.float32, -bound, bound)
        return w, b

    p = {}
    p["w1"], p["b1"] = lin(ks[0], ks[1], d_in, enc_lt)
    p["g1"] = jnp.ones((1, enc_lt), jnp.float32)
    p["bt1"] = jnp.zeros((1, enc_lt), jnp.float32)
    p["w2"], p["b2"] = lin(ks[2], ks[3], enc_lt, enc_lt)
    p["g2"] = jnp.ones((1, enc_lt), jnp.float32)
    p["bt2"] = jnp.zeros((1, enc_lt), jnp.float32)
    p["wm"], p["bm"] = lin(ks[4], ks[5], enc_lt, lt_dim)
    p["wv"], p["bv"] = lin(ks[6], ks[7], enc_lt, lt_dim)
    p["wd1"], p["bd1"] = lin(ks[8], ks[9], lt_dim, enc_lt)
    p["wd2"], p["bd2"] = lin(ks[10], ks[11], enc_lt, enc_lt)
    p["wd3"], p["bd3"] = lin(ks[12], ks[13], enc_lt, d_in)
    return p


if __name__ == "__main__":
    # Small shapes consistent with the module: img_dim=8 -> input_size=3*8*8=192
    img_dim = 8
    enc_lt = 32
    lt_dim = 8
    batch = 8
    d_in = 3 * img_dim * img_dim

    key = jax.random.PRNGKey(0)
    k_x, k_eps, k_p = jax.random.split(key, 3)

    x = jax.random.uniform(k_x, (batch, d_in), jnp.float32)
    eps = jax.random.normal(k_eps, (batch, lt_dim), jnp.float32)
    params = init_params(k_p, d_in, enc_lt, lt_dim)

    x_recon, mu, sig = vaex_forward(x, eps, params, img_dim)
    jax.block_until_ready((x_recon, mu, sig))

    assert x_recon.shape == (batch, 3, img_dim, img_dim)
    assert mu.shape == (batch, lt_dim)
    assert sig.shape == (batch, lt_dim)
    assert bool(jnp.all(jnp.isfinite(x_recon)))
    assert bool(jnp.all((x_recon >= 0.0) & (x_recon <= 1.0)))  # exact sigmoid
    assert bool(jnp.all(mu >= 0.0))      # ReLU head
    assert bool(jnp.all(sig >= 0.0))     # Softplus head
    print("KERNEL_OK")
</pallas_src>

<mosaic_0001>
module attributes {stable_mosaic.version = 11 : i64} {
  func.func @vaex_kernel(%arg0: memref<8x256xbf16, #tpu.memory_space<vmem>>, %arg1: memref<8x128xf32, #tpu.memory_space<vmem>>, %arg2: memref<256x128xbf16, #tpu.memory_space<vmem>>, %arg3: memref<128x128xbf16, #tpu.memory_space<vmem>>, %arg4: memref<128x256xbf16, #tpu.memory_space<vmem>>, %arg5: memref<128x128xbf16, #tpu.memory_space<vmem>>, %arg6: memref<128x128xbf16, #tpu.memory_space<vmem>>, %arg7: memref<128x256xbf16, #tpu.memory_space<vmem>>, %arg8: memref<8x128xf32, #tpu.memory_space<vmem>>, %arg9: memref<1x256xf32, #tpu.memory_space<vmem>>, %arg10: memref<1x256xf32, #tpu.memory_space<vmem>>, %arg11: memref<8x256xf32, #tpu.memory_space<vmem>>, %arg12: memref<8x256xf32, #tpu.memory_space<vmem>>) attributes {dimension_semantics = [], scalar_prefetch = 0 : i64, scratch_operands = 0 : i64, tpu.core_type = #tpu.core_type<tc>} {
    %c0 = arith.constant 0 : index
    %c0_0 = arith.constant 0 : index
    %0 = vector.load %arg0[%c0, %c0_0] : memref<8x256xbf16, #tpu.memory_space<vmem>>, vector<8x256xbf16>
    %c0_1 = arith.constant 0 : index
    %c0_2 = arith.constant 0 : index
    %1 = vector.load %arg8[%c0_1, %c0_2] : memref<8x128xf32, #tpu.memory_space<vmem>>, vector<1x128xf32>
    %c1 = arith.constant 1 : index
    %c0_3 = arith.constant 0 : index
    %2 = vector.load %arg8[%c1, %c0_3] : memref<8x128xf32, #tpu.memory_space<vmem>>, vector<1x128xf32>
    %c2 = arith.constant 2 : index
    %c0_4 = arith.constant 0 : index
    %3 = vector.load %arg8[%c2, %c0_4] : memref<8x128xf32, #tpu.memory_space<vmem>>, vector<1x128xf32>
    %c3 = arith.constant 3 : index
    %c0_5 = arith.constant 0 : index
    %4 = vector.load %arg8[%c3, %c0_5] : memref<8x128xf32, #tpu.memory_space<vmem>>, vector<1x128xf32>
    %c4 = arith.constant 4 : index
    %c0_6 = arith.constant 0 : index
    %5 = vector.load %arg8[%c4, %c0_6] : memref<8x128xf32, #tpu.memory_space<vmem>>, vector<1x128xf32>
    %c5 = arith.constant 5 : index
    %c0_7 = arith.constant 0 : index
    %6 = vector.load %arg8[%c5, %c0_7] : memref<8x128xf32, #tpu.memory_space<vmem>>, vector<1x128xf32>
    %c6 = arith.constant 6 : index
    %c0_8 = arith.constant 0 : index
    %7 = vector.load %arg8[%c6, %c0_8] : memref<8x128xf32, #tpu.memory_space<vmem>>, vector<1x128xf32>
    %c7 = arith.constant 7 : index
    %c0_9 = arith.constant 0 : index
    %8 = vector.load %arg8[%c7, %c0_9] : memref<8x128xf32, #tpu.memory_space<vmem>>, vector<1x128xf32>
    %c0_10 = arith.constant 0 : index
    %c0_11 = arith.constant 0 : index
    %9 = vector.load %arg2[%c0_10, %c0_11] : memref<256x128xbf16, #tpu.memory_space<vmem>>, vector<256x128xbf16>
    %cst = arith.constant dense<0.000000e+00> : vector<8x128xf32>
    %10 = tpu.matmul %0, %9, %cst {dimension_numbers = #tpu.dot_dimension_numbers<[1], [0], [0], [1], [0, 0, 1, 1], [], []>} : vector<8x256xbf16>, vector<256x128xbf16>, vector<8x128xf32> -> vector<8x128xf32>
    %11 = vector.broadcast %1 : vector<1x128xf32> to vector<8x128xf32>
    %12 = arith.addf %10, %11 : vector<8x128xf32>
    %cst_12 = arith.constant dense<0.000000e+00> : vector<128xf32>
    %13 = vector.multi_reduction <add>, %12, %cst_12 [0] : vector<8x128xf32> to vector<128xf32>
    %14 = vector.shape_cast %13 : vector<128xf32> to vector<1x128xf32>
    %cst_13 = arith.constant 8.000000e+00 : f32
    %15 = vector.broadcast %cst_13 : f32 to vector<1x128xf32>
    %16 = arith.divf %14, %15 : vector<1x128xf32>
    %17 = vector.broadcast %16 : vector<1x128xf32> to vector<8x128xf32>
    %18 = arith.subf %12, %17 : vector<8x128xf32>
    %19 = arith.mulf %18, %18 : vector<8x128xf32>
    %cst_14 = arith.constant dense<0.000000e+00> : vector<128xf32>
    %20 = vector.multi_reduction <add>, %19, %cst_14 [0] : vector<8x128xf32> to vector<128xf32>
    %21 = vector.shape_cast %20 : vector<128xf32> to vector<1x128xf32>
    %cst_15 = arith.constant 8.000000e+00 : f32
    %22 = vector.broadcast %cst_15 : f32 to vector<1x128xf32>
    %23 = arith.divf %21, %22 : vector<1x128xf32>
    %cst_16 = arith.constant 9.99999974E-6 : f32
    %24 = vector.broadcast %cst_16 : f32 to vector<1x128xf32>
    %25 = arith.addf %23, %24 : vector<1x128xf32>
    %26 = math.rsqrt %25 : vector<1x128xf32>
    %27 = arith.mulf %2, %26 : vector<1x128xf32>
    %28 = vector.broadcast %27 : vector<1x128xf32> to vector<8x128xf32>
    %29 = arith.mulf %18, %28 : vector<8x128xf32>
    %30 = vector.broadcast %3 : vector<1x128xf32> to vector<8x128xf32>
    %31 = arith.addf %29, %30 : vector<8x128xf32>
    %cst_17 = arith.constant 0.000000e+00 : f32
    %32 = vector.broadcast %cst_17 : f32 to vector<8x128xf32>
    %33 = arith.maximumf %31, %32 : vector<8x128xf32>
    %c0_18 = arith.constant 0 : index
    %c0_19 = arith.constant 0 : index
    %34 = vector.load %arg3[%c0_18, %c0_19] : memref<128x128xbf16, #tpu.memory_space<vmem>>, vector<128x128xbf16>
    %35 = arith.truncf %33 : vector<8x128xf32> to vector<8x128xbf16>
    %cst_20 = arith.constant dense<0.000000e+00> : vector<8x128xf32>
    %36 = tpu.matmul %35, %34, %cst_20 {dimension_numbers = #tpu.dot_dimension_numbers<[1], [0], [0], [1], [0, 0, 1, 1], [], []>} : vector<8x128xbf16>, vector<128x128xbf16>, vector<8x128xf32> -> vector<8x128xf32>
    %37 = vector.broadcast %4 : vector<1x128xf32> to vector<8x128xf32>
    %38 = arith.addf %36, %37 : vector<8x128xf32>
    %cst_21 = arith.constant dense<0.000000e+00> : vector<128xf32>
    %39 = vector.multi_reduction <add>, %38, %cst_21 [0] : vector<8x128xf32> to vector<128xf32>
    %40 = vector.shape_cast %39 : vector<128xf32> to vector<1x128xf32>
    %cst_22 = arith.constant 8.000000e+00 : f32
    %41 = vector.broadcast %cst_22 : f32 to vector<1x128xf32>
    %42 = arith.divf %40, %41 : vector<1x128xf32>
    %43 = vector.broadcast %42 : vector<1x128xf32> to vector<8x128xf32>
    %44 = arith.subf %38, %43 : vector<8x128xf32>
    %45 = arith.mulf %44, %44 : vector<8x128xf32>
    %cst_23 = arith.constant dense<0.000000e+00> : vector<128xf32>
    %46 = vector.multi_reduction <add>, %45, %cst_23 [0] : vector<8x128xf32> to vector<128xf32>
    %47 = vector.shape_cast %46 : vector<128xf32> to vector<1x128xf32>
    %cst_24 = arith.constant 8.000000e+00 : f32
    %48 = vector.broadcast %cst_24 : f32 to vector<1x128xf32>
    %49 = arith.divf %47, %48 : vector<1x128xf32>
    %cst_25 = arith.constant 9.99999974E-6 : f32
    %50 = vector.broadcast %cst_25 : f32 to vector<1x128xf32>
    %51 = arith.addf %49, %50 : vector<1x128xf32>
    %52 = math.rsqrt %51 : vector<1x128xf32>
    %53 = arith.mulf %5, %52 : vector<1x128xf32>
    %54 = vector.broadcast %53 : vector<1x128xf32> to vector<8x128xf32>
    %55 = arith.mulf %44, %54 : vector<8x128xf32>
    %56 = vector.broadcast %6 : vector<1x128xf32> to vector<8x128xf32>
    %57 = arith.addf %55, %56 : vector<8x128xf32>
    %cst_26 = arith.constant 0.000000e+00 : f32
    %58 = vector.broadcast %cst_26 : f32 to vector<8x128xf32>
    %59 = arith.maximumf %57, %58 : vector<8x128xf32>
    %c0_27 = arith.constant 0 : index
    %c0_28 = arith.constant 0 : index
    %60 = vector.load %arg4[%c0_27, %c0_28] : memref<128x256xbf16, #tpu.memory_space<vmem>>, vector<128x256xbf16>
    %61 = arith.truncf %59 : vector<8x128xf32> to vector<8x128xbf16>
    %cst_29 = arith.constant dense<0.000000e+00> : vector<8x256xf32>
    %62 = tpu.matmul %61, %60, %cst_29 {dimension_numbers = #tpu.dot_dimension_numbers<[1], [0], [0], [1], [0, 0, 1, 1], [], []>} : vector<8x128xbf16>, vector<128x256xbf16>, vector<8x256xf32> -> vector<8x256xf32>
    %c0_30 = arith.constant 0 : index
    %c0_31 = arith.constant 0 : index
    %63 = vector.load %arg9[%c0_30, %c0_31] : memref<1x256xf32, #tpu.memory_space<vmem>>, vector<1x256xf32>
    %64 = vector.broadcast %63 : vector<1x256xf32> to vector<8x256xf32>
    %65 = arith.addf %62, %64 : vector<8x256xf32>
    %66 = vector.extract_strided_slice %65 {offsets = [0, 0], sizes = [8, 128], strides = [1, 1]} : vector<8x256xf32> to vector<8x128xf32>
    %cst_32 = arith.constant 0.000000e+00 : f32
    %67 = vector.broadcast %cst_32 : f32 to vector<8x128xf32>
    %68 = arith.maximumf %66, %67 : vector<8x128xf32>
    %69 = vector.extract_strided_slice %65 {offsets = [0, 128], sizes = [8, 128], strides = [1, 1]} : vector<8x256xf32> to vector<8x128xf32>
    %cst_33 = arith.constant 0.000000e+00 : f32
    %70 = vector.broadcast %cst_33 : f32 to vector<8x128xf32>
    %71 = arith.maximumf %69, %70 : vector<8x128xf32>
    %72 = math.absf %69 : vector<8x128xf32>
    %cst_34 = arith.constant 0.000000e+00 : f32
    %73 = vector.broadcast %cst_34 : f32 to vector<8x128xf32>
    %74 = arith.subf %73, %72 : vector<8x128xf32>
    %75 = math.exp %74 : vector<8x128xf32>
    %cst_35 = arith.constant 1.000000e+00 : f32
    %76 = vector.broadcast %cst_35 : f32 to vector<8x128xf32>
    %77 = arith.addf %76, %75 : vector<8x128xf32>
    %78 = math.log %77 : vector<8x128xf32>
    %79 = arith.addf %71, %78 : vector<8x128xf32>
    %c0_36 = arith.constant 0 : index
    %c0_37 = arith.constant 0 : index
    %80 = vector.load %arg12[%c0_36, %c0_37] : memref<8x256xf32, #tpu.memory_space<vmem>>, vector<8x128xf32>
    tpu.vector_store %arg12[%c0_36, %c0_37], %68 {strides = array<i32>} : memref<8x256xf32, #tpu.memory_space<vmem>>, vector<8x128xf32>,
    %c0_38 = arith.constant 0 : index
    %c128 = arith.constant 128 : index
    %81 = vector.load %arg12[%c0_38, %c128] : memref<8x256xf32, #tpu.memory_space<vmem>>, vector<8x128xf32>
    tpu.vector_store %arg12[%c0_38, %c128], %79 {strides = array<i32>} : memref<8x256xf32, #tpu.memory_space<vmem>>, vector<8x128xf32>,
    %c0_39 = arith.constant 0 : index
    %c0_40 = arith.constant 0 : index
    %82 = vector.load %arg1[%c0_39, %c0_40] : memref<8x128xf32, #tpu.memory_space<vmem>>, vector<8x128xf32>
    %83 = arith.mulf %79, %82 : vector<8x128xf32>
    %84 = arith.addf %68, %83 : vector<8x128xf32>
    %c0_41 = arith.constant 0 : index
    %c0_42 = arith.constant 0 : index
    %85 = vector.load %arg5[%c0_41, %c0_42] : memref<128x128xbf16, #tpu.memory_space<vmem>>, vector<128x128xbf16>
    %86 = arith.truncf %84 : vector<8x128xf32> to vector<8x128xbf16>
    %cst_43 = arith.constant dense<0.000000e+00> : vector<8x128xf32>
    %87 = tpu.matmul %86, %85, %cst_43 {dimension_numbers = #tpu.dot_dimension_numbers<[1], [0], [0], [1], [0, 0, 1, 1], [], []>} : vector<8x128xbf16>, vector<128x128xbf16>, vector<8x128xf32> -> vector<8x128xf32>
    %88 = vector.broadcast %7 : vector<1x128xf32> to vector<8x128xf32>
    %89 = arith.addf %87, %88 : vector<8x128xf32>
    %cst_44 = arith.constant 0.000000e+00 : f32
    %90 = vector.broadcast %cst_44 : f32 to vector<8x128xf32>
    %91 = arith.maximumf %89, %90 : vector<8x128xf32>
    %c0_45 = arith.constant 0 : index
    %c0_46 = arith.constant 0 : index
    %92 = vector.load %arg6[%c0_45, %c0_46] : memref<128x128xbf16, #tpu.memory_space<vmem>>, vector<128x128xbf16>
    %93 = arith.truncf %91 : vector<8x128xf32> to vector<8x128xbf16>
    %cst_47 = arith.constant dense<0.000000e+00> : vector<8x128xf32>
    %94 = tpu.matmul %93, %92, %cst_47 {dimension_numbers = #tpu.dot_dimension_numbers<[1], [0], [0], [1], [0, 0, 1, 1], [], []>} : vector<8x128xbf16>, vector<128x128xbf16>, vector<8x128xf32> -> vector<8x128xf32>
    %95 = vector.broadcast %8 : vector<1x128xf32> to vector<8x128xf32>
    %96 = arith.addf %94, %95 : vector<8x128xf32>
    %cst_48 = arith.constant 0.000000e+00 : f32
    %97 = vector.broadcast %cst_48 : f32 to vector<8x128xf32>
    %98 = arith.maximumf %96, %97 : vector<8x128xf32>
    %c0_49 = arith.constant 0 : index
    %c0_50 = arith.constant 0 : index
    %99 = vector.load %arg7[%c0_49, %c0_50] : memref<128x256xbf16, #tpu.memory_space<vmem>>, vector<128x256xbf16>
    %100 = arith.truncf %98 : vector<8x128xf32> to vector<8x128xbf16>
    %cst_51 = arith.constant dense<0.000000e+00> : vector<8x256xf32>
    %101 = tpu.matmul %100, %99, %cst_51 {dimension_numbers = #tpu.dot_dimension_numbers<[1], [0], [0], [1], [0, 0, 1, 1], [], []>} : vector<8x128xbf16>, vector<128x256xbf16>, vector<8x256xf32> -> vector<8x256xf32>
    %c0_52 = arith.constant 0 : index
    %c0_53 = arith.constant 0 : index
    %102 = vector.load %arg10[%c0_52, %c0_53] : memref<1x256xf32, #tpu.memory_space<vmem>>, vector<1x256xf32>
    %103 = vector.broadcast %102 : vector<1x256xf32> to vector<8x256xf32>
    %104 = arith.addf %101, %103 : vector<8x256xf32>
    %cst_54 = arith.constant 0.000000e+00 : f32
    %105 = vector.broadcast %cst_54 : f32 to vector<8x256xf32>
    %106 = arith.subf %105, %104 : vector<8x256xf32>
    %107 = math.exp %106 : vector<8x256xf32>
    %cst_55 = arith.constant 1.000000e+00 : f32
    %108 = vector.broadcast %cst_55 : f32 to vector<8x256xf32>
    %109 = arith.addf %108, %107 : vector<8x256xf32>
    %cst_56 = arith.constant 1.000000e+00 : f32
    %110 = vector.broadcast %cst_56 : f32 to vector<8x256xf32>
    %111 = arith.divf %110, %109 : vector<8x256xf32>
    %c0_57 = arith.constant 0 : index
    %c0_58 = arith.constant 0 : index
    %112 = vector.load %arg11[%c0_57, %c0_58] : memref<8x256xf32, #tpu.memory_space<vmem>>, vector<8x256xf32>
    tpu.vector_store %arg11[%c0_57, %c0_58], %111 {strides = array<i32>} : memref<8x256xf32, #tpu.memory_space<vmem>>, vector<8x256xf32>,
    return
  }
}

</mosaic_0001>

<llo_original>
// kernel: tpu_custom_call.1
$region0: #{tpu_custom_call.1}
  #allocation0 [shape = 'u32[]', space=smem, size = 0x4, offset = 0x4, fixed_abs, tag = 'smem constant byte address 0x4 - core index']
  #allocation1 [shape = 'u32[144,128]{1,0:T(1,128)}', space=vmem, size = 0x12000, scoped, tag = 'internal scratch']
  %s0 = inlined_call_operand.hbm [shape: bf16[8,256], index: 0, kind: input, shape index: {}]
  %s1 = inlined_call_operand.hbm [shape: f32[8,128], index: 1, kind: input, shape index: {}]
  %s2 = inlined_call_operand.hbm [shape: bf16[256,128], index: 2, kind: input, shape index: {}]
  %s3 = inlined_call_operand.hbm [shape: bf16[128,128], index: 3, kind: input, shape index: {}]
  %s4 = inlined_call_operand.hbm [shape: bf16[128,256], index: 4, kind: input, shape index: {}]
  %s5 = inlined_call_operand.hbm [shape: bf16[128,128], index: 5, kind: input, shape index: {}]
  %s6 = inlined_call_operand.hbm [shape: bf16[128,128], index: 6, kind: input, shape index: {}]
  %s7 = inlined_call_operand.hbm [shape: bf16[128,256], index: 7, kind: input, shape index: {}]
  %s8 = inlined_call_operand.vmem [shape: f32[8,128], index: 8, kind: input, shape index: {}]
  %s9 = inlined_call_operand.vmem [shape: f32[1,256], index: 9, kind: input, shape index: {}]
  %s10 = inlined_call_operand.vmem [shape: f32[1,256], index: 10, kind: input, shape index: {}]
  %s11 = inlined_call_operand.hbm [shape: f32[8,256], index: 11, kind: output, shape index: {0}]
  %s12 = inlined_call_operand.hbm [shape: f32[8,256], index: 12, kind: output, shape index: {1}]
  %13 = xla_tuple %s11, %s12
  %s14 = sld [smem:[#allocation0]]
  $region94: #{tpu_custom_call.1} parent=0
    _
  %s16 = ssub.s32 1, %s14
  %s17 = scalar_select 0, %s16, %s14
  $region1: #{tpu_custom_call.1} parent=0
    #allocation2 [shape = 'u8[4096]{0}', space=vmem, size = 0x1000, scoped, tag = 'input window, operand 0, single buffered']
    #allocation3 [shape = 's32[1]{0}', space=sflag, size = 0x4, scoped, tag = 'scoped memory for tpu_custom_call.1']
    #allocation4 [shape = 's32[1]{0}', space=sflag, size = 0x4, scoped, tag = 'scoped memory for tpu_custom_call.1']
    #allocation5 [shape = 'u8[4096]{0}', space=vmem, size = 0x1000, scoped, tag = 'input window, operand 1, single buffered']
    #allocation6 [shape = 's32[1]{0}', space=sflag, size = 0x4, scoped, tag = 'scoped memory for tpu_custom_call.1']
    #allocation7 [shape = 'u8[65536]{0}', space=vmem, size = 0x10000, scoped, tag = 'input window, operand 2, single buffered']
    #allocation8 [shape = 'u8[32768]{0}', space=vmem, size = 0x8000, scoped, tag = 'input window, operand 3, single buffered']
    #allocation9 [shape = 's32[1]{0}', space=sflag, size = 0x4, scoped, tag = 'scoped memory for tpu_custom_call.1']
    #allocation10 [shape = 'u8[65536]{0}', space=vmem, size = 0x10000, scoped, tag = 'input window, operand 4, single buffered']
    #allocation11 [shape = 'u8[32768]{0}', space=vmem, size = 0x8000, scoped, tag = 'input window, operand 5, single buffered']
    #allocation12 [shape = 's32[1]{0}', space=sflag, size = 0x4, scoped, tag = 'scoped memory for tpu_custom_call.1']
    #allocation13 [shape = 'u8[32768]{0}', space=vmem, size = 0x8000, scoped, tag = 'input window, operand 6, single buffered']
    #allocation14 [shape = 'u8[65536]{0}', space=vmem, size = 0x10000, scoped, tag = 'input window, operand 7, single buffered']
    #allocation15 [shape = 's32[1]{0}', space=sflag, size = 0x4, scoped, tag = 'scoped memory for tpu_custom_call.1']
    #allocation16 [shape = 'u8[8192]{0}', space=vmem, size = 0x2000, scoped, tag = 'output window, operand 0, single buffered']
    #allocation17 [shape = 'u8[8192]{0}', space=vmem, size = 0x2000, scoped, tag = 'output window, operand 1, single buffered']
    #allocation18 [shape = 's32[1]{0}', space=sflag, size = 0x4, scoped, tag = 'scoped memory for tpu_custom_call.1']
    %18 = vsyncpa [#allocation3], 0
    %19 = vsyncpa [#allocation6], 0
    %20 = vsyncpa [#allocation9], 0
    %21 = vsyncpa [#allocation12], 0
    %22 = vsyncpa [#allocation15], 0
    %23 = vsyncpa [#allocation4], 0
    %24 = vsyncpa [#allocation18], 0
    // Predicated region
    $region2: #{tpu_custom_call.1} parent=1 // pred_check
      _
    $region3: #{tpu_custom_call.1} parent=1 // pred_check_branch
      %26 = sbr.rel (0) target = $region5
    $region4: #{tpu_custom_call.1} parent=1 // pred_region
      %s28 = ssub.s32 128, 128
      %29 = vsyncadd [#allocation3], %s28
      %s31 = sshll.u32 [#allocation2], 4
      %s32 = int_to_ptr.vmem [resolvable:$true] %s31
      %34 = dma.hbm_to_vmem [thread:$0]  %s0, 128, %s32, [#allocation3]
    $region5: #{tpu_custom_call.1} parent=1 // pred_fallthru
      _
    // Predicated region
    $region6: #{tpu_custom_call.1} parent=1 // pred_check
      _
    $region7: #{tpu_custom_call.1} parent=1 // pred_check_branch
      %36 = sbr.rel (0) target = $region9
    $region8: #{tpu_custom_call.1} parent=1 // pred_region
      %s38 = ssub.s32 128, 128
      %39 = vsyncadd [#allocation6], %s38
      %s41 = sshll.u32 [#allocation5], 4
      %s42 = int_to_ptr.vmem [resolvable:$true] %s41
      %44 = dma.hbm_to_vmem [thread:$0]  %s1, 128, %s42, [#allocation6]
    $region9: #{tpu_custom_call.1} parent=1 // pred_fallthru
      _
    // Predicated region
    $region10: #{tpu_custom_call.1} parent=1 // pred_check
      _
    $region11: #{tpu_custom_call.1} parent=1 // pred_check_branch
      %46 = sbr.rel (0) target = $region13
    $region12: #{tpu_custom_call.1} parent=1 // pred_region
      %s48 = ssub.s32 2048, 2048
      %49 = vsyncadd [#allocation6], %s48
      %s50 = sshll.u32 [#allocation7], 4
      %s51 = int_to_ptr.vmem [resolvable:$true] %s50
      %56 = dma.hbm_to_vmem [thread:$0]  %s2, 2048, %s51, [#allocation6], 64, 64, 4
    $region13: #{tpu_custom_call.1} parent=1 // pred_fallthru
      _
    // Predicated region
    $region14: #{tpu_custom_call.1} parent=1 // pred_check
      _
    $region15: #{tpu_custom_call.1} parent=1 // pred_check_branch
      %58 = sbr.rel (0) target = $region17
    $region16: #{tpu_custom_call.1} parent=1 // pred_region
      %s60 = ssub.s32 1024, 1024
      %61 = vsyncadd [#allocation9], %s60
      %s62 = sshll.u32 [#allocation8], 4
      %s63 = int_to_ptr.vmem [resolvable:$true] %s62
      %68 = dma.hbm_to_vmem [thread:$0]  %s3, 1024, %s63, [#allocation9], 64, 64, 4
    $region17: #{tpu_custom_call.1} parent=1 // pred_fallthru
      _
    // Predicated region
    $region18: #{tpu_custom_call.1} parent=1 // pred_check
      _
    $region19: #{tpu_custom_call.1} parent=1 // pred_check_branch
      %70 = sbr.rel (0) target = $region21
    $region20: #{tpu_custom_call.1} parent=1 // pred_region
      %s72 = ssub.s32 2048, 2048
      %73 = vsyncadd [#allocation9], %s72
      %s74 = sshll.u32 [#allocation10], 4
      %s75 = int_to_ptr.vmem [resolvable:$true] %s74
      %80 = dma.hbm_to_vmem [thread:$0]  %s4, 2048, %s75, [#allocation9], 128, 128, 8
    $region21: #{tpu_custom_call.1} parent=1 // pred_fallthru
      _
    // Predicated region
    $region22: #{tpu_custom_call.1} parent=1 // pred_check
      _
    $region23: #{tpu_custom_call.1} parent=1 // pred_check_branch
      %82 = sbr.rel (0) target = $region25
    $region24: #{tpu_custom_call.1} parent=1 // pred_region
      %s84 = ssub.s32 1024, 1024
      %85 = vsyncadd [#allocation12], %s84
      %s86 = sshll.u32 [#allocation11], 4
      %s87 = int_to_ptr.vmem [resolvable:$true] %s86
      %92 = dma.hbm_to_vmem [thread:$0]  %s5, 1024, %s87, [#allocation12], 64, 64, 4
    $region25: #{tpu_custom_call.1} parent=1 // pred_fallthru
      _
    // Predicated region
    $region26: #{tpu_custom_call.1} parent=1 // pred_check
      _
    $region27: #{tpu_custom_call.1} parent=1 // pred_check_branch
      %94 = sbr.rel (0) target = $region29
    $region28: #{tpu_custom_call.1} parent=1 // pred_region
      %s96 = ssub.s32 1024, 1024
      %97 = vsyncadd [#allocation12], %s96
      %s98 = sshll.u32 [#allocation13], 4
      %s99 = int_to_ptr.vmem [resolvable:$true] %s98
      %104 = dma.hbm_to_vmem [thread:$0]  %s6, 1024, %s99, [#allocation12], 64, 64, 4
    $region29: #{tpu_custom_call.1} parent=1 // pred_fallthru
      _
    // Predicated region
    $region30: #{tpu_custom_call.1} parent=1 // pred_check
      _
    $region31: #{tpu_custom_call.1} parent=1 // pred_check_branch
      %106 = sbr.rel (0) target = $region33
    $region32: #{tpu_custom_call.1} parent=1 // pred_region
      %s108 = ssub.s32 2048, 2048
      %109 = vsyncadd [#allocation15], %s108
      %s110 = sshll.u32 [#allocation14], 4
      %s111 = int_to_ptr.vmem [resolvable:$true] %s110
      %116 = dma.hbm_to_vmem [thread:$0]  %s7, 2048, %s111, [#allocation15], 128, 128, 8
    $region33: #{tpu_custom_call.1} parent=1 // pred_fallthru
      _
    // Predicated region
    $region34: #{tpu_custom_call.1} parent=1 // pred_check
      _
    $region35: #{tpu_custom_call.1} parent=1 // pred_check_branch
      %118 = sbr.rel (0) target = $region37
    $region36: #{tpu_custom_call.1} parent=1 // pred_region
      _
    $region37: #{tpu_custom_call.1} parent=1 // pred_fallthru
      _
    // Predicated region
    $region38: #{tpu_custom_call.1} parent=1 // pred_check
      _
    $region39: #{tpu_custom_call.1} parent=1 // pred_check_branch
      %120 = sbr.rel (0) target = $region41
    $region40: #{tpu_custom_call.1} parent=1 // pred_region
      _
    $region41: #{tpu_custom_call.1} parent=1 // pred_fallthru
      _
    // Predicated region
    $region42: #{tpu_custom_call.1} parent=1 // pred_check
      _
    $region43: #{tpu_custom_call.1} parent=1 // pred_check_branch
      %122 = sbr.rel (0) target = $region45
    $region44: #{tpu_custom_call.1} parent=1 // pred_region
      _
    $region45: #{tpu_custom_call.1} parent=1 // pred_fallthru
      _
    // Predicated region
    $region46: #{tpu_custom_call.1} parent=1 // pred_check
      _
    $region47: #{tpu_custom_call.1} parent=1 // pred_check_branch
      %124 = sbr.rel (0) target = $region49
    $region48: #{tpu_custom_call.1} parent=1 // pred_region
      %125 = dma.done [#allocation3], 128
    $region49: #{tpu_custom_call.1} parent=1 // pred_fallthru
      _
    // Predicated region
    $region50: #{tpu_custom_call.1} parent=1 // pred_check
      _
    $region51: #{tpu_custom_call.1} parent=1 // pred_check_branch
      %127 = sbr.rel (0) target = $region53
    $region52: #{tpu_custom_call.1} parent=1 // pred_region
      %128 = dma.done [#allocation6], 128
    $region53: #{tpu_custom_call.1} parent=1 // pred_fallthru
      _
    // Predicated region
    $region54: #{tpu_custom_call.1} parent=1 // pred_check
      _
    $region55: #{tpu_custom_call.1} parent=1 // pred_check_branch
      %130 = sbr.rel (0) target = $region57
    $region56: #{tpu_custom_call.1} parent=1 // pred_region
      %131 = dma.done [#allocation6], 2048
    $region57: #{tpu_custom_call.1} parent=1 // pred_fallthru
      _
    // Predicated region
    $region58: #{tpu_custom_call.1} parent=1 // pred_check
      _
    $region59: #{tpu_custom_call.1} parent=1 // pred_check_branch
      %133 = sbr.rel (0) target = $region61
    $region60: #{tpu_custom_call.1} parent=1 // pred_region
      %134 = dma.done [#allocation9], 1024
    $region61: #{tpu_custom_call.1} parent=1 // pred_fallthru
      _
    // Predicated region
    $region62: #{tpu_custom_call.1} parent=1 // pred_check
      _
    $region63: #{tpu_custom_call.1} parent=1 // pred_check_branch
      %136 = sbr.rel (0) target = $region65
    $region64: #{tpu_custom_call.1} parent=1 // pred_region
      %137 = dma.done [#allocation9], 2048
    $region65: #{tpu_custom_call.1} parent=1 // pred_fallthru
      _
    // Predicated region
    $region66: #{tpu_custom_call.1} parent=1 // pred_check
      _
    $region67: #{tpu_custom_call.1} parent=1 // pred_check_branch
      %139 = sbr.rel (0) target = $region69
    $region68: #{tpu_custom_call.1} parent=1 // pred_region
      %140 = dma.done [#allocation12], 1024
    $region69: #{tpu_custom_call.1} parent=1 // pred_fallthru
      _
    // Predicated region
    $region70: #{tpu_custom_call.1} parent=1 // pred_check
      _
    $region71: #{tpu_custom_call.1} parent=1 // pred_check_branch
      %142 = sbr.rel (0) target = $region73
    $region72: #{tpu_custom_call.1} parent=1 // pred_region
      %143 = dma.done [#allocation12], 1024
    $region73: #{tpu_custom_call.1} parent=1 // pred_fallthru
      _
    // Predicated region
    $region74: #{tpu_custom_call.1} parent=1 // pred_check
      _
    $region75: #{tpu_custom_call.1} parent=1 // pred_check_branch
      %145 = sbr.rel (0) target = $region77
    $region76: #{tpu_custom_call.1} parent=1 // pred_region
      %146 = dma.done [#allocation15], 2048
    $region77: #{tpu_custom_call.1} parent=1 // pred_fallthru
      _
    %v148 = vld [vmem:[#allocation2] sm:$0xff]
    %v149 = vld [vmem:[%s8] sm:$0x1]
    %v150 = vld [vmem:[%s8 + $0x1] sm:$0x1]
    %v151 = vld [vmem:[%s8 + $0x2] sm:$0x1]
    %v152 = vld [vmem:[%s8 + $0x3] sm:$0x1]
    %v153 = vld [vmem:[%s8 + $0x4] sm:$0x1]
    %v154 = vld [vmem:[%s8 + $0x5] sm:$0x1]
    %v155 = vld [vmem:[%s8 + $0x6] sm:$0x1]
    %v156 = vld [vmem:[%s8 + $0x7] sm:$0x1]
    %v157 = vld [vmem:[#allocation7] sm:$0xf]
    %v158 = vld [vmem:[#allocation7 + $0x4] sm:$0xf]
    %v159 = vld [vmem:[#allocation7 + $0x8] sm:$0xf]
    %v160 = vld [vmem:[#allocation7 + $0xc] sm:$0xf]
    %v161 = vld [vmem:[#allocation7 + $0x10] sm:$0xf]
    %v162 = vld [vmem:[#allocation7 + $0x14] sm:$0xf]
    %v163 = vld [vmem:[#allocation7 + $0x18] sm:$0xf]
    %v164 = vld [vmem:[#allocation7 + $0x1c] sm:$0xf]
    %v165 = vld [vmem:[#allocation7 + $0x20] sm:$0xf]
    %v166 = vld [vmem:[#allocation7 + $0x24] sm:$0xf]
    %v167 = vld [vmem:[#allocation7 + $0x28] sm:$0xf]
    %v168 = vld [vmem:[#allocation7 + $0x2c] sm:$0xf]
    %v169 = vld [vmem:[#allocation7 + $0x30] sm:$0xf]
    %v170 = vld [vmem:[#allocation7 + $0x34] sm:$0xf]
    %v171 = vld [vmem:[#allocation7 + $0x38] sm:$0xf]
    %v172 = vld [vmem:[#allocation7 + $0x3c] sm:$0xf]
    %v173 = vld [vmem:[#allocation7 + $0x40] sm:$0xf]
    %v174 = vld [vmem:[#allocation7 + $0x44] sm:$0xf]
    %v175 = vld [vmem:[#allocation7 + $0x48] sm:$0xf]
    %v176 = vld [vmem:[#allocation7 + $0x4c] sm:$0xf]
    %v177 = vld [vmem:[#allocation7 + $0x50] sm:$0xf]
    %v178 = vld [vmem:[#allocation7 + $0x54] sm:$0xf]
    %v179 = vld [vmem:[#allocation7 + $0x58] sm:$0xf]
    %v180 = vld [vmem:[#allocation7 + $0x5c] sm:$0xf]
    %v181 = vld [vmem:[#allocation7 + $0x60] sm:$0xf]
    %v182 = vld [vmem:[#allocation7 + $0x64] sm:$0xf]
    %v183 = vld [vmem:[#allocation7 + $0x68] sm:$0xf]
    %v184 = vld [vmem:[#allocation7 + $0x6c] sm:$0xf]
    %v185 = vld [vmem:[#allocation7 + $0x70] sm:$0xf]
    %v186 = vld [vmem:[#allocation7 + $0x74] sm:$0xf]
    %v187 = vld [vmem:[#allocation7 + $0x78] sm:$0xf]
    %v188 = vld [vmem:[#allocation7 + $0x7c] sm:$0xf]
    %v189 = vlaneseq
    %v190 = vshrl.u32 %v189, 7
    %v191 = vsub.s32 0, %v190
    %v192 = vrot.slane %v149, %v191
    %v194 = vunpack.c.l.b16 %v148
    %v195 = vunpack.c.h.b16 %v148
    %v196 = vpack.c.b16 %v194, %v194
    %v197 = vpack.c.b16 %v195, %v195
    %v232 = vunpack.c.l.b16 %v157
    %v233 = vunpack.c.l.b16 %v158
    %v234 = vunpack.c.l.b16 %v159
    %v235 = vunpack.c.l.b16 %v160
    %v236 = vunpack.c.l.b16 %v161
    %v237 = vunpack.c.l.b16 %v162
    %v238 = vunpack.c.l.b16 %v163
    %v239 = vunpack.c.l.b16 %v164
    %v240 = vunpack.c.l.b16 %v165
    %v241 = vunpack.c.l.b16 %v166
    %v242 = vunpack.c.l.b16 %v167
    %v243 = vunpack.c.l.b16 %v168
    %v244 = vunpack.c.l.b16 %v169
    %v245 = vunpack.c.l.b16 %v170
    %v246 = vunpack.c.l.b16 %v171
    %v247 = vunpack.c.l.b16 %v172
    %v248 = vunpack.c.l.b16 %v173
    %v249 = vunpack.c.l.b16 %v174
    %v250 = vunpack.c.l.b16 %v175
    %v251 = vunpack.c.l.b16 %v176
    %v252 = vunpack.c.l.b16 %v177
    %v253 = vunpack.c.l.b16 %v178
    %v254 = vunpack.c.l.b16 %v179
    %v255 = vunpack.c.l.b16 %v180
    %v256 = vunpack.c.l.b16 %v181
    %v257 = vunpack.c.l.b16 %v182
    %v258 = vunpack.c.l.b16 %v183
    %v259 = vunpack.c.l.b16 %v184
    %v260 = vunpack.c.l.b16 %v185
    %v261 = vunpack.c.l.b16 %v186
    %v262 = vunpack.c.l.b16 %v187
    %v263 = vunpack.c.l.b16 %v188
    %v264 = vpack.c.b16 %v233, %v232
    %v265 = vpack.c.b16 %v235, %v234
    %v266 = vpack.c.b16 %v237, %v236
    %v267 = vpack.c.b16 %v239, %v238
    %v268 = vpack.c.b16 %v241, %v240
    %v269 = vpack.c.b16 %v243, %v242
    %v270 = vpack.c.b16 %v245, %v244
    %v271 = vpack.c.b16 %v247, %v246
    %v272 = vpack.c.b16 %v249, %v248
    %v273 = vpack.c.b16 %v251, %v250
    %v274 = vpack.c.b16 %v253, %v252
    %v275 = vpack.c.b16 %v255, %v254
    %v276 = vpack.c.b16 %v257, %v256
    %v277 = vpack.c.b16 %v259, %v258
    %v278 = vpack.c.b16 %v261, %v260
    %v279 = vpack.c.b16 %v263, %v262
    %296 = vmatprep.subr.bf16.mxu0 0
    %297 = vmatpush1.bf16.msra.mxu0 %v264
    %298 = vmatprep.subr.bf16.mxu0 0
    %299 = vmatpush1.bf16.msra.mxu0 %v265
    %300 = vmatprep.subr.bf16.mxu0 0
    %301 = vmatpush1.bf16.msra.mxu0 %v266
    %302 = vmatprep.subr.bf16.mxu0 0
    %303 = vmatpush1.bf16.msra.mxu0 %v267
    %304 = vmatprep.subr.bf16.mxu0 0
    %305 = vmatpush1.bf16.msra.mxu0 %v268
    %306 = vmatprep.subr.bf16.mxu0 0
    %307 = vmatpush1.bf16.msra.mxu0 %v269
    %308 = vmatprep.subr.bf16.mxu0 0
    %309 = vmatpush1.bf16.msra.mxu0 %v270
    %310 = vmatprep.subr.bf16.mxu0 0
    %311 = vmatpush1.bf16.msra.mxu0 %v271
    %312 = vmatprep.subr.bf16.mxu0 0
    %313 = vmatpush1.bf16.msra.mxu0 %v272
    %314 = vmatprep.subr.bf16.mxu0 0
    %315 = vmatpush1.bf16.msra.mxu0 %v273
    %316 = vmatprep.subr.bf16.mxu0 0
    %317 = vmatpush1.bf16.msra.mxu0 %v274
    %318 = vmatprep.subr.bf16.mxu0 0
    %319 = vmatpush1.bf16.msra.mxu0 %v275
    %320 = vmatprep.subr.bf16.mxu0 0
    %321 = vmatpush1.bf16.msra.mxu0 %v276
    %322 = vmatprep.subr.bf16.mxu0 0
    %323 = vmatpush1.bf16.msra.mxu0 %v277
    %324 = vmatprep.subr.bf16.mxu0 0
    %325 = vmatpush1.bf16.msra.mxu0 %v278
    %326 = vmatprep.subr.bf16.mxu0 0
    %327 = vmatpush1.bf16.msra.mxu0 %v279
    %328 = vmatprep.mubr.bf16.mxu0 %v197
    %329 = vmatmul.mubr.bf16.gmra.mrb[0].mxu0 %v196
    %v330 = vpop.f32.mrb[0].mxu0
    %v331 = vadd.f32 %v192, %v330
    %v332 = vpop.f32.mrb[0].mxu0
    %v333 = vpop.f32.mrb[0].mxu0
    %v334 = vpop.f32.mrb[0].mxu0
    %335 = vdwg.mxu0
    %v336 = vrot.slane %v331, 4
    %v337 = vadd.f32 %v331, %v336
    %v338 = vrot.slane %v337, 2
    %v339 = vadd.f32 %v337, %v338
    %v340 = vrot.slane %v339, 1
    %v341 = vadd.f32 %v339, %v340
    %v342 = vrcp.pop 8.0
    %v343 = vmul.f32 %v341, %v342
    %v344 = vsub.f32 %v331, %v343
    %v345 = vmul.f32 %v344, %v344
    %v346 = vrot.slane %v345, 4
    %v347 = vadd.f32 %v345, %v346
    %v348 = vrot.slane %v347, 2
    %v349 = vadd.f32 %v347, %v348
    %v350 = vrot.slane %v349, 1
    %v351 = vadd.f32 %v349, %v350
    %v352 = vmul.f32 %v351, %v342
    %v353 = vadd.f32 %v352, 1e-05
    %v354 = vrsqrt.pop %v353
    %v355 = vmul.f32 %v150, %v354
    %v356 = vlaneseq
    %v357 = vshrl.u32 %v356, 7
    %v358 = vsub.s32 0, %v357
    %v359 = vrot.slane %v355, %v358
    %v360 = vmul.f32 %v344, %v359
    %v361 = vlaneseq
    %v362 = vshrl.u32 %v361, 7
    %v363 = vsub.s32 0, %v362
    %v364 = vrot.slane %v151, %v363
    %v365 = vadd.f32 %v360, %v364
    %v366 = vmax.f32 %v365, 0.0
    %v367 = vld [vmem:[#allocation8] sm:$0xf]
    %v368 = vld [vmem:[#allocation8 + $0x4] sm:$0xf]
    %v369 = vld [vmem:[#allocation8 + $0x8] sm:$0xf]
    %v370 = vld [vmem:[#allocation8 + $0xc] sm:$0xf]
    %v371 = vld [vmem:[#allocation8 + $0x10] sm:$0xf]
    %v372 = vld [vmem:[#allocation8 + $0x14] sm:$0xf]
    %v373 = vld [vmem:[#allocation8 + $0x18] sm:$0xf]
    %v374 = vld [vmem:[#allocation8 + $0x1c] sm:$0xf]
    %v375 = vld [vmem:[#allocation8 + $0x20] sm:$0xf]
    %v376 = vld [vmem:[#allocation8 + $0x24] sm:$0xf]
    %v377 = vld [vmem:[#allocation8 + $0x28] sm:$0xf]
    %v378 = vld [vmem:[#allocation8 + $0x2c] sm:$0xf]
    %v379 = vld [vmem:[#allocation8 + $0x30] sm:$0xf]
    %v380 = vld [vmem:[#allocation8 + $0x34] sm:$0xf]
    %v381 = vld [vmem:[#allocation8 + $0x38] sm:$0xf]
    %v382 = vld [vmem:[#allocation8 + $0x3c] sm:$0xf]
    %v383 = vpack.c.bf16 %v366, %v366
    %v384 = vlaneseq
    %v385 = vshrl.u32 %v384, 7
    %v386 = vsub.s32 0, %v385
    %v387 = vrot.slane %v152, %v386
    %v404 = vunpack.c.l.b16 %v367
    %v405 = vunpack.c.l.b16 %v368
    %v406 = vunpack.c.l.b16 %v369
    %v407 = vunpack.c.l.b16 %v370
    %v408 = vunpack.c.l.b16 %v371
    %v409 = vunpack.c.l.b16 %v372
    %v410 = vunpack.c.l.b16 %v373
    %v411 = vunpack.c.l.b16 %v374
    %v412 = vunpack.c.l.b16 %v375
    %v413 = vunpack.c.l.b16 %v376
    %v414 = vunpack.c.l.b16 %v377
    %v415 = vunpack.c.l.b16 %v378
    %v416 = vunpack.c.l.b16 %v379
    %v417 = vunpack.c.l.b16 %v380
    %v418 = vunpack.c.l.b16 %v381
    %v419 = vunpack.c.l.b16 %v382
    %v420 = vpack.c.b16 %v405, %v404
    %v421 = vpack.c.b16 %v407, %v406
    %v422 = vpack.c.b16 %v409, %v408
    %v423 = vpack.c.b16 %v411, %v410
    %v424 = vpack.c.b16 %v413, %v412
    %v425 = vpack.c.b16 %v415, %v414
    %v426 = vpack.c.b16 %v417, %v416
    %v427 = vpack.c.b16 %v419, %v418
    %436 = vmatprep.subr.bf16.mxu0 0
    %437 = vmatpush1.bf16.msra.mxu0 %v420
    %438 = vmatprep.subr.bf16.mxu0 0
    %439 = vmatpush1.bf16.msra.mxu0 %v421
    %440 = vmatprep.subr.bf16.mxu0 0
    %441 = vmatpush1.bf16.msra.mxu0 %v422
    %442 = vmatprep.subr.bf16.mxu0 0
    %443 = vmatpush1.bf16.msra.mxu0 %v423
    %444 = vmatprep.subr.bf16.mxu0 0
    %445 = vmatpush1.bf16.msra.mxu0 %v424
    %446 = vmatprep.subr.bf16.mxu0 0
    %447 = vmatpush1.bf16.msra.mxu0 %v425
    %448 = vmatprep.subr.bf16.mxu0 0
    %449 = vmatpush1.bf16.msra.mxu0 %v426
    %450 = vmatprep.subr.bf16.mxu0 0
    %451 = vmatpush1.bf16.msra.mxu0 %v427
    %452 = vmatprep.subr.bf16.mxu0 0
    %453 = vmatpush1.bf16.msra.mxu0 0
    %454 = vmatprep.subr.bf16.mxu0 0
    %455 = vmatpush1.bf16.msra.mxu0 0
    %456 = vmatprep.subr.bf16.mxu0 0
    %457 = vmatpush1.bf16.msra.mxu0 0
    %458 = vmatprep.subr.bf16.mxu0 0
    %459 = vmatpush1.bf16.msra.mxu0 0
    %460 = vmatprep.subr.bf16.mxu0 0
    %461 = vmatpush1.bf16.msra.mxu0 0
    %462 = vmatprep.subr.bf16.mxu0 0
    %463 = vmatpush1.bf16.msra.mxu0 0
    %464 = vmatprep.subr.bf16.mxu0 0
    %465 = vmatpush1.bf16.msra.mxu0 0
    %466 = vmatprep.subr.bf16.mxu0 0
    %467 = vmatpush1.bf16.msra.mxu0 0
    %468 = vmatprep.mubr.bf16.mxu0 0
    %469 = vmatmul.mubr.bf16.gmra.mrb[0].mxu0 %v383
    %v470 = vpop.f32.mrb[0].mxu0
    %v471 = vadd.f32 %v387, %v470
    %v472 = vpop.f32.mrb[0].mxu0
    %v473 = vpop.f32.mrb[0].mxu0
    %v474 = vpop.f32.mrb[0].mxu0
    %475 = vdwg.mxu0
    %v476 = vrot.slane %v471, 4
    %v477 = vadd.f32 %v471, %v476
    %v478 = vrot.slane %v477, 2
    %v479 = vadd.f32 %v477, %v478
    %v480 = vrot.slane %v479, 1
    %v481 = vadd.f32 %v479, %v480
    %v482 = vmul.f32 %v481, %v342
    %v483 = vsub.f32 %v471, %v482
    %v484 = vmul.f32 %v483, %v483
    %v485 = vrot.slane %v484, 4
    %v486 = vadd.f32 %v484, %v485
    %v487 = vrot.slane %v486, 2
    %v488 = vadd.f32 %v486, %v487
    %v489 = vrot.slane %v488, 1
    %v490 = vadd.f32 %v488, %v489
    %v491 = vmul.f32 %v490, %v342
    %v492 = vadd.f32 %v491, 1e-05
    %v493 = vrsqrt.pop %v492
    %v494 = vmul.f32 %v153, %v493
    %v495 = vlaneseq
    %v496 = vshrl.u32 %v495, 7
    %v497 = vsub.s32 0, %v496
    %v498 = vrot.slane %v494, %v497
    %v499 = vmul.f32 %v483, %v498
    %v500 = vlaneseq
    %v501 = vshrl.u32 %v500, 7
    %v502 = vsub.s32 0, %v501
    %v503 = vrot.slane %v154, %v502
    %v504 = vadd.f32 %v499, %v503
    %v505 = vmax.f32 %v504, 0.0
    %v506 = vld [vmem:[#allocation10] sm:$0xff]
    %v507 = vld [vmem:[#allocation10 + $0x8] sm:$0xff]
    %v508 = vld [vmem:[#allocation10 + $0x10] sm:$0xff]
    %v509 = vld [vmem:[#allocation10 + $0x18] sm:$0xff]
    %v510 = vld [vmem:[#allocation10 + $0x20] sm:$0xff]
    %v511 = vld [vmem:[#allocation10 + $0x28] sm:$0xff]
    %v512 = vld [vmem:[#allocation10 + $0x30] sm:$0xff]
    %v513 = vld [vmem:[#allocation10 + $0x38] sm:$0xff]
    %v514 = vld [vmem:[#allocation10 + $0x40] sm:$0xff]
    %v515 = vld [vmem:[#allocation10 + $0x48] sm:$0xff]
    %v516 = vld [vmem:[#allocation10 + $0x50] sm:$0xff]
    %v517 = vld [vmem:[#allocation10 + $0x58] sm:$0xff]
    %v518 = vld [vmem:[#allocation10 + $0x60] sm:$0xff]
    %v519 = vld [vmem:[#allocation10 + $0x68] sm:$0xff]
    %v520 = vld [vmem:[#allocation10 + $0x70] sm:$0xff]
    %v521 = vld [vmem:[#allocation10 + $0x78] sm:$0xff]
    %v522 = vpack.c.bf16 %v505, %v505
    %v523 = vld [vmem:[%s9] sm:$0x3]
    %v525 = vlaneseq
    %v526 = vshrl.u32 %v525, 7
    %v527 = vsub.s32 0, %v526
    %v528 = vrot.slane %v523, %v527
    %v529 = vlaneseq
    %v530 = vshrl.u32 %v529, 7
    %v531 = vsub.s32 1, %v530
    %v532 = vrot.slane %v523, %v531
    %v551 = vunpack.c.l.b16 %v506
    %v552 = vunpack.c.h.b16 %v506
    %v553 = vunpack.c.l.b16 %v507
    %v554 = vunpack.c.h.b16 %v507
    %v555 = vunpack.c.l.b16 %v508
    %v556 = vunpack.c.h.b16 %v508
    %v557 = vunpack.c.l.b16 %v509
    %v558 = vunpack.c.h.b16 %v509
    %v559 = vunpack.c.l.b16 %v510
    %v560 = vunpack.c.h.b16 %v510
    %v561 = vunpack.c.l.b16 %v511
    %v562 = vunpack.c.h.b16 %v511
    %v563 = vunpack.c.l.b16 %v512
    %v564 = vunpack.c.h.b16 %v512
    %v565 = vunpack.c.l.b16 %v513
    %v566 = vunpack.c.h.b16 %v513
    %v567 = vunpack.c.l.b16 %v514
    %v568 = vunpack.c.h.b16 %v514
    %v569 = vunpack.c.l.b16 %v515
    %v570 = vunpack.c.h.b16 %v515
    %v571 = vunpack.c.l.b16 %v516
    %v572 = vunpack.c.h.b16 %v516
    %v573 = vunpack.c.l.b16 %v517
    %v574 = vunpack.c.h.b16 %v517
    %v575 = vunpack.c.l.b16 %v518
    %v576 = vunpack.c.h.b16 %v518
    %v577 = vunpack.c.l.b16 %v519
    %v578 = vunpack.c.h.b16 %v519
    %v579 = vunpack.c.l.b16 %v520
    %v580 = vunpack.c.h.b16 %v520
    %v581 = vunpack.c.l.b16 %v521
    %v582 = vunpack.c.h.b16 %v521
    %v583 = vpack.c.b16 %v553, %v551
    %v584 = vpack.c.b16 %v554, %v552
    %v585 = vpack.c.b16 %v557, %v555
    %v586 = vpack.c.b16 %v558, %v556
    %v587 = vpack.c.b16 %v561, %v559
    %v588 = vpack.c.b16 %v562, %v560
    %v589 = vpack.c.b16 %v565, %v563
    %v590 = vpack.c.b16 %v566, %v564
    %v591 = vpack.c.b16 %v569, %v567
    %v592 = vpack.c.b16 %v570, %v568
    %v593 = vpack.c.b16 %v573, %v571
    %v594 = vpack.c.b16 %v574, %v572
    %v595 = vpack.c.b16 %v577, %v575
    %v596 = vpack.c.b16 %v578, %v576
    %v597 = vpack.c.b16 %v581, %v579
    %v598 = vpack.c.b16 %v582, %v580
    %615 = vmatprep.subr.bf16.mxu0 %v584
    %616 = vmatpush1.bf16.msra.mxu0 %v583
    %617 = vmatprep.subr.bf16.mxu0 %v586
    %618 = vmatpush1.bf16.msra.mxu0 %v585
    %619 = vmatprep.subr.bf16.mxu0 %v588
    %620 = vmatpush1.bf16.msra.mxu0 %v587
    %621 = vmatprep.subr.bf16.mxu0 %v590
    %622 = vmatpush1.bf16.msra.mxu0 %v589
    %623 = vmatprep.subr.bf16.mxu0 %v592
    %624 = vmatpush1.bf16.msra.mxu0 %v591
    %625 = vmatprep.subr.bf16.mxu0 %v594
    %626 = vmatpush1.bf16.msra.mxu0 %v593
    %627 = vmatprep.subr.bf16.mxu0 %v596
    %628 = vmatpush1.bf16.msra.mxu0 %v595
    %629 = vmatprep.subr.bf16.mxu0 %v598
    %630 = vmatpush1.bf16.msra.mxu0 %v597
    %631 = vmatprep.subr.bf16.mxu0 0
    %632 = vmatpush1.bf16.msra.mxu0 0
    %633 = vmatprep.subr.bf16.mxu0 0
    %634 = vmatpush1.bf16.msra.mxu0 0
    %635 = vmatprep.subr.bf16.mxu0 0
    %636 = vmatpush1.bf16.msra.mxu0 0
    %637 = vmatprep.subr.bf16.mxu0 0
    %638 = vmatpush1.bf16.msra.mxu0 0
    %639 = vmatprep.subr.bf16.mxu0 0
    %640 = vmatpush1.bf16.msra.mxu0 0
    %641 = vmatprep.subr.bf16.mxu0 0
    %642 = vmatpush1.bf16.msra.mxu0 0
    %643 = vmatprep.subr.bf16.mxu0 0
    %644 = vmatpush1.bf16.msra.mxu0 0
    %645 = vmatprep.subr.bf16.mxu0 0
    %646 = vmatpush1.bf16.msra.mxu0 0
    %647 = vmatprep.mubr.bf16.mxu0 0
    %648 = vmatmul.mubr.bf16.gmra.mrb[0].mxu0 %v522
    %v649 = vpop.f32.mrb[0].mxu0
    %v650 = vadd.f32 %v528, %v649
    %v651 = vpop.f32.mrb[0].mxu0
    %v652 = vadd.f32 %v532, %v651
    %v653 = vpop.f32.mrb[0].mxu0
    %v654 = vpop.f32.mrb[0].mxu0
    %655 = vdwg.mxu0
    %v656 = vmax.f32 %v650, 0.0
    %v657 = vmax.f32 %v652, 0.0
    %v658 = vand.u32 2147483647, %v652
    %v659 = vsub.f32 0.0, %v658
    %v660 = vmul.f32 %v659, 1.442695
    %v661 = vpow.pop %v660
    %v662 = vadd.f32 %v661, 1.0
    %v663 = vlog2.pop %v662
    %v664 = vmul.f32 %v663, 0.6931472
    %v665 = vadd.f32 %v657, %v664
    %666 = vst [vmem:[#allocation17] sm:$0xff] %v656
    %667 = vst [vmem:[#allocation17 + $0x8] sm:$0xff] %v665
    %v668 = vld [vmem:[#allocation5] sm:$0xff]
    %v669 = vmul.f32 %v665, %v668
    %v670 = vadd.f32 %v656, %v669
    %v671 = vld [vmem:[#allocation11] sm:$0xf]
    %v672 = vld [vmem:[#allocation11 + $0x4] sm:$0xf]
    %v673 = vld [vmem:[#allocation11 + $0x8] sm:$0xf]
    %v674 = vld [vmem:[#allocation11 + $0xc] sm:$0xf]
    %v675 = vld [vmem:[#allocation11 + $0x10] sm:$0xf]
    %v676 = vld [vmem:[#allocation11 + $0x14] sm:$0xf]
    %v677 = vld [vmem:[#allocation11 + $0x18] sm:$0xf]
    %v678 = vld [vmem:[#allocation11 + $0x1c] sm:$0xf]
    %v679 = vld [vmem:[#allocation11 + $0x20] sm:$0xf]
    %v680 = vld [vmem:[#allocation11 + $0x24] sm:$0xf]
    %v681 = vld [vmem:[#allocation11 + $0x28] sm:$0xf]
    %v682 = vld [vmem:[#allocation11 + $0x2c] sm:$0xf]
    %v683 = vld [vmem:[#allocation11 + $0x30] sm:$0xf]
    %v684 = vld [vmem:[#allocation11 + $0x34] sm:$0xf]
    %v685 = vld [vmem:[#allocation11 + $0x38] sm:$0xf]
    %v686 = vld [vmem:[#allocation11 + $0x3c] sm:$0xf]
    %v687 = vpack.c.bf16 %v670, %v670
    %v688 = vlaneseq
    %v689 = vshrl.u32 %v688, 7
    %v690 = vsub.s32 0, %v689
    %v691 = vrot.slane %v155, %v690
    %v708 = vunpack.c.l.b16 %v671
    %v709 = vunpack.c.l.b16 %v672
    %v710 = vunpack.c.l.b16 %v673
    %v711 = vunpack.c.l.b16 %v674
    %v712 = vunpack.c.l.b16 %v675
    %v713 = vunpack.c.l.b16 %v676
    %v714 = vunpack.c.l.b16 %v677
    %v715 = vunpack.c.l.b16 %v678
    %v716 = vunpack.c.l.b16 %v679
    %v717 = vunpack.c.l.b16 %v680
    %v718 = vunpack.c.l.b16 %v681
    %v719 = vunpack.c.l.b16 %v682
    %v720 = vunpack.c.l.b16 %v683
    %v721 = vunpack.c.l.b16 %v684
    %v722 = vunpack.c.l.b16 %v685
    %v723 = vunpack.c.l.b16 %v686
    %v724 = vpack.c.b16 %v709, %v708
    %v725 = vpack.c.b16 %v711, %v710
    %v726 = vpack.c.b16 %v713, %v712
    %v727 = vpack.c.b16 %v715, %v714
    %v728 = vpack.c.b16 %v717, %v716
    %v729 = vpack.c.b16 %v719, %v718
    %v730 = vpack.c.b16 %v721, %v720
    %v731 = vpack.c.b16 %v723, %v722
    %740 = vmatprep.subr.bf16.mxu0 0
    %741 = vmatpush1.bf16.msra.mxu0 %v724
    %742 = vmatprep.subr.bf16.mxu0 0
    %743 = vmatpush1.bf16.msra.mxu0 %v725
    %744 = vmatprep.subr.bf16.mxu0 0
    %745 = vmatpush1.bf16.msra.mxu0 %v726
    %746 = vmatprep.subr.bf16.mxu0 0
    %747 = vmatpush1.bf16.msra.mxu0 %v727
    %748 = vmatprep.subr.bf16.mxu0 0
    %749 = vmatpush1.bf16.msra.mxu0 %v728
    %750 = vmatprep.subr.bf16.mxu0 0
    %751 = vmatpush1.bf16.msra.mxu0 %v729
    %752 = vmatprep.subr.bf16.mxu0 0
    %753 = vmatpush1.bf16.msra.mxu0 %v730
    %754 = vmatprep.subr.bf16.mxu0 0
    %755 = vmatpush1.bf16.msra.mxu0 %v731
    %756 = vmatprep.subr.bf16.mxu0 0
    %757 = vmatpush1.bf16.msra.mxu0 0
    %758 = vmatprep.subr.bf16.mxu0 0
    %759 = vmatpush1.bf16.msra.mxu0 0
    %760 = vmatprep.subr.bf16.mxu0 0
    %761 = vmatpush1.bf16.msra.mxu0 0
    %762 = vmatprep.subr.bf16.mxu0 0
    %763 = vmatpush1.bf16.msra.mxu0 0
    %764 = vmatprep.subr.bf16.mxu0 0
    %765 = vmatpush1.bf16.msra.mxu0 0
    %766 = vmatprep.subr.bf16.mxu0 0
    %767 = vmatpush1.bf16.msra.mxu0 0
    %768 = vmatprep.subr.bf16.mxu0 0
    %769 = vmatpush1.bf16.msra.mxu0 0
    %770 = vmatprep.subr.bf16.mxu0 0
    %771 = vmatpush1.bf16.msra.mxu0 0
    %772 = vmatprep.mubr.bf16.mxu0 0
    %773 = vmatmul.mubr.bf16.gmra.mrb[0].mxu0 %v687
    %v774 = vpop.f32.mrb[0].mxu0
    %v775 = vadd.f32 %v691, %v774
    %v776 = vpop.f32.mrb[0].mxu0
    %v777 = vpop.f32.mrb[0].mxu0
    %v778 = vpop.f32.mrb[0].mxu0
    %779 = vdwg.mxu0
    %v780 = vmax.f32 %v775, 0.0
    %v781 = vld [vmem:[#allocation13] sm:$0xf]
    %v782 = vld [vmem:[#allocation13 + $0x4] sm:$0xf]
    %v783 = vld [vmem:[#allocation13 + $0x8] sm:$0xf]
    %v784 = vld [vmem:[#allocation13 + $0xc] sm:$0xf]
    %v785 = vld [vmem:[#allocation13 + $0x10] sm:$0xf]
    %v786 = vld [vmem:[#allocation13 + $0x14] sm:$0xf]
    %v787 = vld [vmem:[#allocation13 + $0x18] sm:$0xf]
    %v788 = vld [vmem:[#allocation13 + $0x1c] sm:$0xf]
    %v789 = vld [vmem:[#allocation13 + $0x20] sm:$0xf]
    %v790 = vld [vmem:[#allocation13 + $0x24] sm:$0xf]
    %v791 = vld [vmem:[#allocation13 + $0x28] sm:$0xf]
    %v792 = vld [vmem:[#allocation13 + $0x2c] sm:$0xf]
    %v793 = vld [vmem:[#allocation13 + $0x30] sm:$0xf]
    %v794 = vld [vmem:[#allocation13 + $0x34] sm:$0xf]
    %v795 = vld [vmem:[#allocation13 + $0x38] sm:$0xf]
    %v796 = vld [vmem:[#allocation13 + $0x3c] sm:$0xf]
    %v797 = vpack.c.bf16 %v780, %v780
    %v798 = vlaneseq
    %v799 = vshrl.u32 %v798, 7
    %v800 = vsub.s32 0, %v799
    %v801 = vrot.slane %v156, %v800
    %v818 = vunpack.c.l.b16 %v781
    %v819 = vunpack.c.l.b16 %v782
    %v820 = vunpack.c.l.b16 %v783
    %v821 = vunpack.c.l.b16 %v784
    %v822 = vunpack.c.l.b16 %v785
    %v823 = vunpack.c.l.b16 %v786
    %v824 = vunpack.c.l.b16 %v787
    %v825 = vunpack.c.l.b16 %v788
    %v826 = vunpack.c.l.b16 %v789
    %v827 = vunpack.c.l.b16 %v790
    %v828 = vunpack.c.l.b16 %v791
    %v829 = vunpack.c.l.b16 %v792
    %v830 = vunpack.c.l.b16 %v793
    %v831 = vunpack.c.l.b16 %v794
    %v832 = vunpack.c.l.b16 %v795
    %v833 = vunpack.c.l.b16 %v796
    %v834 = vpack.c.b16 %v819, %v818
    %v835 = vpack.c.b16 %v821, %v820
    %v836 = vpack.c.b16 %v823, %v822
    %v837 = vpack.c.b16 %v825, %v824
    %v838 = vpack.c.b16 %v827, %v826
    %v839 = vpack.c.b16 %v829, %v828
    %v840 = vpack.c.b16 %v831, %v830
    %v841 = vpack.c.b16 %v833, %v832
    %850 = vmatprep.subr.bf16.mxu0 0
    %851 = vmatpush1.bf16.msra.mxu0 %v834
    %852 = vmatprep.subr.bf16.mxu0 0
    %853 = vmatpush1.bf16.msra.mxu0 %v835
    %854 = vmatprep.subr.bf16.mxu0 0
    %855 = vmatpush1.bf16.msra.mxu0 %v836
    %856 = vmatprep.subr.bf16.mxu0 0
    %857 = vmatpush1.bf16.msra.mxu0 %v837
    %858 = vmatprep.subr.bf16.mxu0 0
    %859 = vmatpush1.bf16.msra.mxu0 %v838
    %860 = vmatprep.subr.bf16.mxu0 0
    %861 = vmatpush1.bf16.msra.mxu0 %v839
    %862 = vmatprep.subr.bf16.mxu0 0
    %863 = vmatpush1.bf16.msra.mxu0 %v840
    %864 = vmatprep.subr.bf16.mxu0 0
    %865 = vmatpush1.bf16.msra.mxu0 %v841
    %866 = vmatprep.subr.bf16.mxu0 0
    %867 = vmatpush1.bf16.msra.mxu0 0
    %868 = vmatprep.subr.bf16.mxu0 0
    %869 = vmatpush1.bf16.msra.mxu0 0
    %870 = vmatprep.subr.bf16.mxu0 0
    %871 = vmatpush1.bf16.msra.mxu0 0
    %872 = vmatprep.subr.bf16.mxu0 0
    %873 = vmatpush1.bf16.msra.mxu0 0
    %874 = vmatprep.subr.bf16.mxu0 0
    %875 = vmatpush1.bf16.msra.mxu0 0
    %876 = vmatprep.subr.bf16.mxu0 0
    %877 = vmatpush1.bf16.msra.mxu0 0
    %878 = vmatprep.subr.bf16.mxu0 0
    %879 = vmatpush1.bf16.msra.mxu0 0
    %880 = vmatprep.subr.bf16.mxu0 0
    %881 = vmatpush1.bf16.msra.mxu0 0
    %882 = vmatprep.mubr.bf16.mxu0 0
    %883 = vmatmul.mubr.bf16.gmra.mrb[0].mxu0 %v797
    %v884 = vpop.f32.mrb[0].mxu0
    %v885 = vadd.f32 %v801, %v884
    %v886 = vpop.f32.mrb[0].mxu0
    %v887 = vpop.f32.mrb[0].mxu0
    %v888 = vpop.f32.mrb[0].mxu0
    %889 = vdwg.mxu0
    %v890 = vmax.f32 %v885, 0.0
    %v891 = vld [vmem:[#allocation14] sm:$0xff]
    %v892 = vld [vmem:[#allocation14 + $0x8] sm:$0xff]
    %v893 = vld [vmem:[#allocation14 + $0x10] sm:$0xff]
    %v894 = vld [vmem:[#allocation14 + $0x18] sm:$0xff]
    %v895 = vld [vmem:[#allocation14 + $0x20] sm:$0xff]
    %v896 = vld [vmem:[#allocation14 + $0x28] sm:$0xff]
    %v897 = vld [vmem:[#allocation14 + $0x30] sm:$0xff]
    %v898 = vld [vmem:[#allocation14 + $0x38] sm:$0xff]
    %v899 = vld [vmem:[#allocation14 + $0x40] sm:$0xff]
    %v900 = vld [vmem:[#allocation14 + $0x48] sm:$0xff]
    %v901 = vld [vmem:[#allocation14 + $0x50] sm:$0xff]
    %v902 = vld [vmem:[#allocation14 + $0x58] sm:$0xff]
    %v903 = vld [vmem:[#allocation14 + $0x60] sm:$0xff]
    %v904 = vld [vmem:[#allocation14 + $0x68] sm:$0xff]
    %v905 = vld [vmem:[#allocation14 + $0x70] sm:$0xff]
    %v906 = vld [vmem:[#allocation14 + $0x78] sm:$0xff]
    %v907 = vpack.c.bf16 %v890, %v890
    %v908 = vld [vmem:[%s10] sm:$0x3]
    %v910 = vlaneseq
    %v911 = vshrl.u32 %v910, 7
    %v912 = vsub.s32 0, %v911
    %v913 = vrot.slane %v908, %v912
    %v914 = vlaneseq
    %v915 = vshrl.u32 %v914, 7
    %v916 = vsub.s32 1, %v915
    %v917 = vrot.slane %v908, %v916
    %v936 = vunpack.c.l.b16 %v891
    %v937 = vunpack.c.h.b16 %v891
    %v938 = vunpack.c.l.b16 %v892
    %v939 = vunpack.c.h.b16 %v892
    %v940 = vunpack.c.l.b16 %v893
    %v941 = vunpack.c.h.b16 %v893
    %v942 = vunpack.c.l.b16 %v894
    %v943 = vunpack.c.h.b16 %v894
    %v944 = vunpack.c.l.b16 %v895
    %v945 = vunpack.c.h.b16 %v895
    %v946 = vunpack.c.l.b16 %v896
    %v947 = vunpack.c.h.b16 %v896
    %v948 = vunpack.c.l.b16 %v897
    %v949 = vunpack.c.h.b16 %v897
    %v950 = vunpack.c.l.b16 %v898
    %v951 = vunpack.c.h.b16 %v898
    %v952 = vunpack.c.l.b16 %v899
    %v953 = vunpack.c.h.b16 %v899
    %v954 = vunpack.c.l.b16 %v900
    %v955 = vunpack.c.h.b16 %v900
    %v956 = vunpack.c.l.b16 %v901
    %v957 = vunpack.c.h.b16 %v901
    %v958 = vunpack.c.l.b16 %v902
    %v959 = vunpack.c.h.b16 %v902
    %v960 = vunpack.c.l.b16 %v903
    %v961 = vunpack.c.h.b16 %v903
    %v962 = vunpack.c.l.b16 %v904
    %v963 = vunpack.c.h.b16 %v904
    %v964 = vunpack.c.l.b16 %v905
    %v965 = vunpack.c.h.b16 %v905
    %v966 = vunpack.c.l.b16 %v906
    %v967 = vunpack.c.h.b16 %v906
    %v968 = vpack.c.b16 %v938, %v936
    %v969 = vpack.c.b16 %v939, %v937
    %v970 = vpack.c.b16 %v942, %v940
    %v971 = vpack.c.b16 %v943, %v941
    %v972 = vpack.c.b16 %v946, %v944
    %v973 = vpack.c.b16 %v947, %v945
    %v974 = vpack.c.b16 %v950, %v948
    %v975 = vpack.c.b16 %v951, %v949
    %v976 = vpack.c.b16 %v954, %v952
    %v977 = vpack.c.b16 %v955, %v953
    %v978 = vpack.c.b16 %v958, %v956
    %v979 = vpack.c.b16 %v959, %v957
    %v980 = vpack.c.b16 %v962, %v960
    %v981 = vpack.c.b16 %v963, %v961
    %v982 = vpack.c.b16 %v966, %v964
    %v983 = vpack.c.b16 %v967, %v965
    %1000 = vmatprep.subr.bf16.mxu0 %v969
    %1001 = vmatpush1.bf16.msra.mxu0 %v968
    %1002 = vmatprep.subr.bf16.mxu0 %v971
    %1003 = vmatpush1.bf16.msra.mxu0 %v970
    %1004 = vmatprep.subr.bf16.mxu0 %v973
    %1005 = vmatpush1.bf16.msra.mxu0 %v972
    %1006 = vmatprep.subr.bf16.mxu0 %v975
    %1007 = vmatpush1.bf16.msra.mxu0 %v974
    %1008 = vmatprep.subr.bf16.mxu0 %v977
    %1009 = vmatpush1.bf16.msra.mxu0 %v976
    %1010 = vmatprep.subr.bf16.mxu0 %v979
    %1011 = vmatpush1.bf16.msra.mxu0 %v978
    %1012 = vmatprep.subr.bf16.mxu0 %v981
    %1013 = vmatpush1.bf16.msra.mxu0 %v980
    %1014 = vmatprep.subr.bf16.mxu0 %v983
    %1015 = vmatpush1.bf16.msra.mxu0 %v982
    %1016 = vmatprep.subr.bf16.mxu0 0
    %1017 = vmatpush1.bf16.msra.mxu0 0
    %1018 = vmatprep.subr.bf16.mxu0 0
    %1019 = vmatpush1.bf16.msra.mxu0 0
    %1020 = vmatprep.subr.bf16.mxu0 0
    %1021 = vmatpush1.bf16.msra.mxu0 0
    %1022 = vmatprep.subr.bf16.mxu0 0
    %1023 = vmatpush1.bf16.msra.mxu0 0
    %1024 = vmatprep.subr.bf16.mxu0 0
    %1025 = vmatpush1.bf16.msra.mxu0 0
    %1026 = vmatprep.subr.bf16.mxu0 0
    %1027 = vmatpush1.bf16.msra.mxu0 0
    %1028 = vmatprep.subr.bf16.mxu0 0
    %1029 = vmatpush1.bf16.msra.mxu0 0
    %1030 = vmatprep.subr.bf16.mxu0 0
    %1031 = vmatpush1.bf16.msra.mxu0 0
    %1032 = vmatprep.mubr.bf16.mxu0 0
    %1033 = vmatmul.mubr.bf16.gmra.mrb[0].mxu0 %v907
    %v1034 = vpop.f32.mrb[0].mxu0
    %v1035 = vadd.f32 %v913, %v1034
    %v1036 = vpop.f32.mrb[0].mxu0
    %v1037 = vadd.f32 %v917, %v1036
    %v1038 = vpop.f32.mrb[0].mxu0
    %v1039 = vpop.f32.mrb[0].mxu0
    %1040 = vdwg.mxu0
    %v1041 = vsub.f32 0.0, %v1035
    %v1042 = vsub.f32 0.0, %v1037
    %v1043 = vmul.f32 %v1041, 1.442695
    %v1044 = vpow.pop %v1043
    %v1045 = vmul.f32 %v1042, 1.442695
    %v1046 = vpow.pop %v1045
    %v1047 = vadd.f32 %v1044, 1.0
    %v1048 = vadd.f32 %v1046, 1.0
    %v1049 = vrcp.pop %v1047
    %v1050 = vmul.f32 1.0, %v1049
    %v1051 = vrcp.pop %v1048
    %v1052 = vmul.f32 1.0, %v1051
    %1053 = vst [vmem:[#allocation16] sm:$0xff] %v1050
    %1054 = vst [vmem:[#allocation16 + $0x8] sm:$0xff] %v1052
    // Predicated region
    $region78: #{tpu_custom_call.1} parent=1 // pred_check
      _
    $region79: #{tpu_custom_call.1} parent=1 // pred_check_branch
      %1056 = sbr.rel (0) target = $region81
    $region80: #{tpu_custom_call.1} parent=1 // pred_region
      %s1058 = ssub.s32 256, 256
      %1059 = vsyncadd [#allocation4], %s1058
      %s1061 = sshll.u32 [#allocation16], 4
      %s1062 = int_to_ptr.vmem [resolvable:$true] %s1061
      %1064 = dma.vmem_to_hbm [thread:$0]  %s1062, 256, %s11, [#allocation4]
    $region81: #{tpu_custom_call.1} parent=1 // pred_fallthru
      _
    // Predicated region
    $region82: #{tpu_custom_call.1} parent=1 // pred_check
      _
    $region83: #{tpu_custom_call.1} parent=1 // pred_check_branch
      %1066 = sbr.rel (0) target = $region85
    $region84: #{tpu_custom_call.1} parent=1 // pred_region
      %s1068 = ssub.s32 256, 256
      %1069 = vsyncadd [#allocation18], %s1068
      %s1071 = sshll.u32 [#allocation17], 4
      %s1072 = int_to_ptr.vmem [resolvable:$true] %s1071
      %1074 = dma.vmem_to_hbm [thread:$0]  %s1072, 256, %s12, [#allocation18]
    $region85: #{tpu_custom_call.1} parent=1 // pred_fallthru
      _
    // Predicated region
    $region86: #{tpu_custom_call.1} parent=1 // pred_check
      _
    $region87: #{tpu_custom_call.1} parent=1 // pred_check_branch
      %1076 = sbr.rel (0) target = $region89
    $region88: #{tpu_custom_call.1} parent=1 // pred_region
      %1077 = dma.done [#allocation4], 256
    $region89: #{tpu_custom_call.1} parent=1 // pred_fallthru
      _
    // Predicated region
    $region90: #{tpu_custom_call.1} parent=1 // pred_check
      _
    $region91: #{tpu_custom_call.1} parent=1 // pred_check_branch
      %1079 = sbr.rel (0) target = $region93
    $region92: #{tpu_custom_call.1} parent=1 // pred_region
      %1080 = dma.done [#allocation18], 256
    $region93: #{tpu_custom_call.1} parent=1 // pred_fallthru
      _
    %1081 = vsyncpa [#allocation3], 1
    %1082 = vsyncpa [#allocation6], 1
    %1083 = vsyncpa [#allocation9], 1
    %1084 = vsyncpa [#allocation12], 1
    %1085 = vsyncpa [#allocation15], 1
    %1086 = vsyncpa [#allocation4], 1
    %1087 = vsyncpa [#allocation18], 1

</llo_original>
